<compile_context>
chip_gen: v7x
topology: tpu7x:2x2x1
jax: 0.10.0
libtpu: 0.0.40
codegen_flags: <defaults>
</compile_context>

<pallas_src>
import jax
import jax.numpy as jnp
from jax.experimental import pallas as pl
from jax.experimental.pallas import tpu as pltpu


def _posenc_proj_kernel(pos_embed_ref, w_ref, b_ref, out_ref):
    # pos_embed_ref: (T, P)    bf16 sinusoidal encodings (precomputed, const-folded)
    # w_ref:         (P, R*F)  bf16 projection weight, pre-tiled along lanes
    # b_ref:         (1, R*F)  f32 projection bias,   pre-tiled along lanes
    # out_ref:       (T, R*F)  f32 lane-dense output (full-lane unmasked stores)
    acc = jnp.dot(pos_embed_ref[...], w_ref[...],
                  preferred_element_type=jnp.float32)          # single MXU matmul
    out_ref[...] = acc + b_ref[...]


def object_pointer_posenc_v2p1(num_prompt_pointers: int,
                               num_previous_frame_pointers: int,
                               posenc_scale_factor: jax.Array,
                               proj_weight_tiled_bf16: jax.Array,
                               proj_bias_tiled_f32: jax.Array,
                               num_tokens_per_pointer: int,
                               *,
                               previous_is_recent_first: bool = True) -> jax.Array:
    """Pallas equivalent of ObjectPointerPosEnc_v2p1.forward.

    proj_weight_tiled_bf16: (features_per_image_token, R * features_per_memory_token)
        = torch weight transposed and tiled R times along the output dim.
    Returns (total_ptrs * R, features_per_memory_token), float32.
    """
    num_prompt_pointers = int(num_prompt_pointers)
    num_previous_frame_pointers = int(num_previous_frame_pointers)
    total_ptrs = num_prompt_pointers + num_previous_frame_pointers
    feat_img, rf = proj_weight_tiled_bf16.shape
    repeats = int(num_tokens_per_pointer)
    feat_mem = rf // repeats
    half = posenc_scale_factor.shape[-1]

    if total_ptrs == 0:  # zero-sized blocks are not legal in pallas_call
        return jnp.zeros((0, feat_mem), dtype=jnp.float32)

    # --- wrapper-side setup (trace-time Python ints + constant scale vector;
    #     constant-folded by XLA, never touches the kernel) --------------------
    first_prev_idx = 1.0 / max(total_ptrs - 1, 1)
    start_idx, end_idx = ((first_prev_idx, 1.0) if previous_is_recent_first
                          else (1.0, first_prev_idx))
    pos_norm = jnp.zeros((total_ptrs,), dtype=jnp.float32)
    if num_previous_frame_pointers > 0:
        lin = jnp.linspace(start_idx, end_idx, num_previous_frame_pointers,
                           dtype=jnp.float32)
        pos_norm = pos_norm.at[num_prompt_pointers:].set(lin)

    base = pos_norm[:, None] * posenc_scale_factor.reshape(1, half).astype(jnp.float32)
    pos_embed = jnp.concatenate([jnp.sin(base), jnp.cos(base)], axis=-1)   # (T, P)
    pos_embed = pos_embed.astype(jnp.bfloat16)

    out_lane_dense = pl.pallas_call(
        _posenc_proj_kernel,
        out_shape=jax.ShapeDtypeStruct((total_ptrs, rf), jnp.float32),
        in_specs=[
            pl.BlockSpec(memory_space=pltpu.MemorySpace.VMEM),   # pos_embed (T, P)
            pl.BlockSpec(memory_space=pltpu.MemorySpace.VMEM),   # W tiled   (P, R*F)
            pl.BlockSpec(memory_space=pltpu.MemorySpace.VMEM),   # bias      (1, R*F)
        ],
        out_specs=pl.BlockSpec(memory_space=pltpu.MemorySpace.VMEM),
    )(pos_embed, proj_weight_tiled_bf16, proj_bias_tiled_f32)

    # Row-major reshape (T, R*F) -> (T*R, F) == repeat_interleave(R, dim=0).
    return out_lane_dense.reshape(total_ptrs * repeats, feat_mem)


class ObjectPointerPosEncV2p1:
    """JAX/Pallas mirror of the PyTorch ObjectPointerPosEnc_v2p1 module."""

    def __init__(self, features_per_image_token: int, features_per_memory_token: int,
                 *, key: jax.Array):
        self.features_per_image_token = features_per_image_token
        self.features_per_memory_token = features_per_memory_token
        self.num_tokens_per_pointer = features_per_image_token // features_per_memory_token

        num_posenc_features = features_per_image_token // 2
        k = jnp.arange(num_posenc_features, dtype=jnp.float32)
        scale = 2.0 * jnp.floor(k / 2.0) / num_posenc_features   # torch float '//'
        self.posenc_scale_factor = 1.0 / (10000.0 ** scale)      # (P/2,)

        # Learned linear projection (stored transposed w.r.t. torch nn.Linear).
        k_w, k_b = jax.random.split(key)
        bound = 1.0 / (features_per_image_token ** 0.5)
        self.proj_weight_t = jax.random.uniform(
            k_w, (features_per_image_token, features_per_memory_token),
            dtype=jnp.float32, minval=-bound, maxval=bound)
        self.proj_bias = jax.random.uniform(
            k_b, (features_per_memory_token,),
            dtype=jnp.float32, minval=-bound, maxval=bound)

        # Pre-tiled (lane-dense) weight/bias so the kernel matmul directly emits
        # the repeated (T, R*F) layout; weight kept in bf16 for fewer MXU passes
        # and half the weight DMA bytes.
        r = self.num_tokens_per_pointer
        self.proj_weight_tiled_bf16 = jnp.tile(
            self.proj_weight_t, (1, r)).astype(jnp.bfloat16)          # (P, R*F)
        self.proj_bias_tiled_f32 = jnp.tile(
            self.proj_bias, (r,)).reshape(1, r * features_per_memory_token)  # (1, R*F)

    def __call__(self, num_prompt_pointers: int, num_previous_frame_pointers: int,
                 previous_is_recent_first: bool = True) -> jax.Array:
        return object_pointer_posenc_v2p1(
            num_prompt_pointers, num_previous_frame_pointers,
            self.posenc_scale_factor,
            self.proj_weight_tiled_bf16, self.proj_bias_tiled_f32,
            self.num_tokens_per_pointer,
            previous_is_recent_first=previous_is_recent_first)


def _reference_forward(num_prompt_pointers, num_previous_frame_pointers,
                       posenc_scale_factor, proj_weight_t, proj_bias,
                       previous_is_recent_first=True):
    """Pure-JAX port of the PyTorch forward, for correctness checking."""
    total_ptrs = num_prompt_pointers + num_previous_frame_pointers
    feat_img, feat_mem = proj_weight_t.shape
    repeats = feat_img // feat_mem
    first_prev_idx = 1.0 / max(total_ptrs - 1, 1)
    start_idx, end_idx = ((first_prev_idx, 1.0) if previous_is_recent_first
                          else (1.0, first_prev_idx))
    pos_norm = jnp.zeros((total_ptrs,), dtype=jnp.float32)
    if num_previous_frame_pointers > 0:
        pos_norm = pos_norm.at[num_prompt_pointers:].set(
            jnp.linspace(start_idx, end_idx, num_previous_frame_pointers,
                         dtype=jnp.float32))
    base = pos_norm[:, None] * posenc_scale_factor[None, :]
    pos_embed = jnp.concatenate([jnp.sin(base), jnp.cos(base)], axis=-1)
    proj = jnp.dot(pos_embed, proj_weight_t,
                   precision=jax.lax.Precision.HIGHEST) + proj_bias[None, :]
    return jnp.repeat(proj, repeats, axis=0)   # repeat_interleave along rows


if __name__ == "__main__":
    key = jax.random.PRNGKey(0)

    features_per_image_token = 256     # SAMv2.1 defaults -> 4 tokens per pointer
    features_per_memory_token = 64
    num_prompt_pointers = 2
    num_previous_frame_pointers = 6    # total_ptrs = 8 -> output (32, 64)

    model = ObjectPointerPosEncV2p1(
        features_per_image_token, features_per_memory_token, key=key)

    out = model(num_prompt_pointers, num_previous_frame_pointers,
                previous_is_recent_first=True)
    out = jax.block_until_ready(out)

    expected_rows = ((num_prompt_pointers + num_previous_frame_pointers)
                     * model.num_tokens_per_pointer)
    assert out.shape == (expected_rows, features_per_memory_token), out.shape
    assert out.dtype == jnp.float32

    ref = _reference_forward(
        num_prompt_pointers, num_previous_frame_pointers,
        model.posenc_scale_factor, model.proj_weight_t, model.proj_bias,
        previous_is_recent_first=True)
    ref = jax.block_until_ready(ref)
    # bf16 matmul operands (f32 accumulate) -> loose tolerance vs f32-HIGHEST ref.
    assert jnp.allclose(out, ref, rtol=3e-2, atol=3e-2), \
        float(jnp.max(jnp.abs(out - ref)))

    print("KERNEL_OK")
</pallas_src>

<mosaic_0001>
module attributes {stable_mosaic.version = 11 : i64} {
  func.func @_posenc_proj_kernel(%arg0: memref<8x256xbf16, #tpu.memory_space<vmem>>, %arg1: memref<256x256xbf16, #tpu.memory_space<vmem>>, %arg2: memref<1x256xf32, #tpu.memory_space<vmem>>, %arg3: memref<8x256xf32, #tpu.memory_space<vmem>>) attributes {dimension_semantics = [], scalar_prefetch = 0 : i64, scratch_operands = 0 : i64, tpu.core_type = #tpu.core_type<tc>} {
    %c0 = arith.constant 0 : index
    %c0_0 = arith.constant 0 : index
    %0 = vector.load %arg0[%c0, %c0_0] : memref<8x256xbf16, #tpu.memory_space<vmem>>, vector<8x256xbf16>
    %c0_1 = arith.constant 0 : index
    %c0_2 = arith.constant 0 : index
    %1 = vector.load %arg1[%c0_1, %c0_2] : memref<256x256xbf16, #tpu.memory_space<vmem>>, vector<256x256xbf16>
    %cst = arith.constant dense<0.000000e+00> : vector<8x256xf32>
    %2 = tpu.matmul %0, %1, %cst {dimension_numbers = #tpu.dot_dimension_numbers<[1], [0], [0], [1], [0, 0, 1, 1], [], []>} : vector<8x256xbf16>, vector<256x256xbf16>, vector<8x256xf32> -> vector<8x256xf32>
    %c0_3 = arith.constant 0 : index
    %c0_4 = arith.constant 0 : index
    %3 = vector.load %arg2[%c0_3, %c0_4] : memref<1x256xf32, #tpu.memory_space<vmem>>, vector<1x256xf32>
    %4 = vector.broadcast %3 : vector<1x256xf32> to vector<8x256xf32>
    %5 = arith.addf %2, %4 : vector<8x256xf32>
    %c0_5 = arith.constant 0 : index
    %c0_6 = arith.constant 0 : index
    %6 = vector.load %arg3[%c0_5, %c0_6] : memref<8x256xf32, #tpu.memory_space<vmem>>, vector<8x256xf32>
    tpu.vector_store %arg3[%c0_5, %c0_6], %5 {strides = array<i32>} : memref<8x256xf32, #tpu.memory_space<vmem>>, vector<8x256xf32>,
    return
  }
}

</mosaic_0001>

<llo_original>
// kernel: tpu_custom_call.1
$region0: #{tpu_custom_call.1}
  #allocation0 [shape = 'u32[]', space=smem, size = 0x4, offset = 0x4, fixed_abs, tag = 'smem constant byte address 0x4 - core index']
  #allocation1 [shape = 'u32[144,128]{1,0:T(1,128)}', space=vmem, size = 0x12000, scoped, tag = 'internal scratch']
  %s0 = inlined_call_operand.hbm [shape: bf16[8,256], index: 0, kind: input, shape index: {}]
  %s1 = inlined_call_operand.hbm [shape: bf16[256,256], index: 1, kind: input, shape index: {}]
  %s2 = inlined_call_operand.vmem [shape: f32[1,256], index: 2, kind: input, shape index: {}]
  %s3 = inlined_call_operand.hbm [shape: f32[8,256], index: 3, kind: output, shape index: {}]
  %s4 = sld [smem:[#allocation0]]
  $region30: #{tpu_custom_call.1} parent=0
    _
  %s6 = ssub.s32 1, %s4
  %s7 = scalar_select 0, %s6, %s4
  $region1: #{tpu_custom_call.1} parent=0
    #allocation2 [shape = 'u8[4096]{0}', space=vmem, size = 0x1000, scoped, tag = 'input window, operand 0, single buffered']
    #allocation3 [shape = 's32[1]{0}', space=sflag, size = 0x4, scoped, tag = 'scoped memory for tpu_custom_call.1']
    #allocation4 [shape = 's32[1]{0}', space=sflag, size = 0x4, scoped, tag = 'scoped memory for tpu_custom_call.1']
    #allocation5 [shape = 'u8[131072]{0}', space=vmem, size = 0x20000, scoped, tag = 'input window, operand 1, single buffered']
    #allocation6 [shape = 's32[1]{0}', space=sflag, size = 0x4, scoped, tag = 'scoped memory for tpu_custom_call.1']
    #allocation7 [shape = 'u8[8192]{0}', space=vmem, size = 0x2000, scoped, tag = 'output window, operand 0, single buffered']
    %8 = vsyncpa [#allocation3], 0
    %9 = vsyncpa [#allocation6], 0
    %10 = vsyncpa [#allocation4], 0
    // Predicated region
    $region2: #{tpu_custom_call.1} parent=1 // pred_check
      _
    $region3: #{tpu_custom_call.1} parent=1 // pred_check_branch
      %12 = sbr.rel (0) target = $region5
    $region4: #{tpu_custom_call.1} parent=1 // pred_region
      %s14 = ssub.s32 128, 128
      %15 = vsyncadd [#allocation3], %s14
      %s17 = sshll.u32 [#allocation2], 4
      %s18 = int_to_ptr.vmem [resolvable:$true] %s17
      %20 = dma.hbm_to_vmem [thread:$0]  %s0, 128, %s18, [#allocation3]
    $region5: #{tpu_custom_call.1} parent=1 // pred_fallthru
      _
    // Predicated region
    $region6: #{tpu_custom_call.1} parent=1 // pred_check
      _
    $region7: #{tpu_custom_call.1} parent=1 // pred_check_branch
      %22 = sbr.rel (0) target = $region9
    $region8: #{tpu_custom_call.1} parent=1 // pred_region
      %s24 = ssub.s32 4096, 4096
      %25 = vsyncadd [#allocation6], %s24
      %s26 = sshll.u32 [#allocation5], 4
      %s27 = int_to_ptr.vmem [resolvable:$true] %s26
      %32 = dma.hbm_to_vmem [thread:$0]  %s1, 4096, %s27, [#allocation6], 128, 128, 8
    $region9: #{tpu_custom_call.1} parent=1 // pred_fallthru
      _
    // Predicated region
    $region10: #{tpu_custom_call.1} parent=1 // pred_check
      _
    $region11: #{tpu_custom_call.1} parent=1 // pred_check_branch
      %34 = sbr.rel (0) target = $region13
    $region12: #{tpu_custom_call.1} parent=1 // pred_region
      _
    $region13: #{tpu_custom_call.1} parent=1 // pred_fallthru
      _
    // Predicated region
    $region14: #{tpu_custom_call.1} parent=1 // pred_check
      _
    $region15: #{tpu_custom_call.1} parent=1 // pred_check_branch
      %36 = sbr.rel (0) target = $region17
    $region16: #{tpu_custom_call.1} parent=1 // pred_region
      %37 = dma.done [#allocation3], 128
    $region17: #{tpu_custom_call.1} parent=1 // pred_fallthru
      _
    // Predicated region
    $region18: #{tpu_custom_call.1} parent=1 // pred_check
      _
    $region19: #{tpu_custom_call.1} parent=1 // pred_check_branch
      %39 = sbr.rel (0) target = $region21
    $region20: #{tpu_custom_call.1} parent=1 // pred_region
      %40 = dma.done [#allocation6], 4096
    $region21: #{tpu_custom_call.1} parent=1 // pred_fallthru
      _
    %v41 = vld [vmem:[#allocation2] sm:$0xff]
    %v42 = vld [vmem:[#allocation5] sm:$0xff]
    %v43 = vld [vmem:[#allocation5 + $0x8] sm:$0xff]
    %v44 = vld [vmem:[#allocation5 + $0x10] sm:$0xff]
    %v45 = vld [vmem:[#allocation5 + $0x18] sm:$0xff]
    %v46 = vld [vmem:[#allocation5 + $0x20] sm:$0xff]
    %v47 = vld [vmem:[#allocation5 + $0x28] sm:$0xff]
    %v48 = vld [vmem:[#allocation5 + $0x30] sm:$0xff]
    %v49 = vld [vmem:[#allocation5 + $0x38] sm:$0xff]
    %v50 = vld [vmem:[#allocation5 + $0x40] sm:$0xff]
    %v51 = vld [vmem:[#allocation5 + $0x48] sm:$0xff]
    %v52 = vld [vmem:[#allocation5 + $0x50] sm:$0xff]
    %v53 = vld [vmem:[#allocation5 + $0x58] sm:$0xff]
    %v54 = vld [vmem:[#allocation5 + $0x60] sm:$0xff]
    %v55 = vld [vmem:[#allocation5 + $0x68] sm:$0xff]
    %v56 = vld [vmem:[#allocation5 + $0x70] sm:$0xff]
    %v57 = vld [vmem:[#allocation5 + $0x78] sm:$0xff]
    %v58 = vld [vmem:[#allocation5 + $0x80] sm:$0xff]
    %v59 = vld [vmem:[#allocation5 + $0x88] sm:$0xff]
    %v60 = vld [vmem:[#allocation5 + $0x90] sm:$0xff]
    %v61 = vld [vmem:[#allocation5 + $0x98] sm:$0xff]
    %v62 = vld [vmem:[#allocation5 + $0xa0] sm:$0xff]
    %v63 = vld [vmem:[#allocation5 + $0xa8] sm:$0xff]
    %v64 = vld [vmem:[#allocation5 + $0xb0] sm:$0xff]
    %v65 = vld [vmem:[#allocation5 + $0xb8] sm:$0xff]
    %v66 = vld [vmem:[#allocation5 + $0xc0] sm:$0xff]
    %v67 = vld [vmem:[#allocation5 + $0xc8] sm:$0xff]
    %v68 = vld [vmem:[#allocation5 + $0xd0] sm:$0xff]
    %v69 = vld [vmem:[#allocation5 + $0xd8] sm:$0xff]
    %v70 = vld [vmem:[#allocation5 + $0xe0] sm:$0xff]
    %v71 = vld [vmem:[#allocation5 + $0xe8] sm:$0xff]
    %v72 = vld [vmem:[#allocation5 + $0xf0] sm:$0xff]
    %v73 = vld [vmem:[#allocation5 + $0xf8] sm:$0xff]
    %v74 = vld [vmem:[%s2] sm:$0x3]
    %v76 = vlaneseq
    %v77 = vshrl.u32 %v76, 7
    %v78 = vsub.s32 0, %v77
    %v79 = vrot.slane %v74, %v78
    %v80 = vlaneseq
    %v81 = vshrl.u32 %v80, 7
    %v82 = vsub.s32 1, %v81
    %v83 = vrot.slane %v74, %v82
    %v87 = vunpack.c.l.b16 %v41
    %v88 = vunpack.c.h.b16 %v41
    %v89 = vpack.c.b16 %v87, %v87
    %v90 = vpack.c.b16 %v88, %v88
    %v125 = vunpack.c.l.b16 %v42
    %v126 = vunpack.c.h.b16 %v42
    %v127 = vunpack.c.l.b16 %v43
    %v128 = vunpack.c.h.b16 %v43
    %v129 = vunpack.c.l.b16 %v44
    %v130 = vunpack.c.h.b16 %v44
    %v131 = vunpack.c.l.b16 %v45
    %v132 = vunpack.c.h.b16 %v45
    %v133 = vunpack.c.l.b16 %v46
    %v134 = vunpack.c.h.b16 %v46
    %v135 = vunpack.c.l.b16 %v47
    %v136 = vunpack.c.h.b16 %v47
    %v137 = vunpack.c.l.b16 %v48
    %v138 = vunpack.c.h.b16 %v48
    %v139 = vunpack.c.l.b16 %v49
    %v140 = vunpack.c.h.b16 %v49
    %v141 = vunpack.c.l.b16 %v50
    %v142 = vunpack.c.h.b16 %v50
    %v143 = vunpack.c.l.b16 %v51
    %v144 = vunpack.c.h.b16 %v51
    %v145 = vunpack.c.l.b16 %v52
    %v146 = vunpack.c.h.b16 %v52
    %v147 = vunpack.c.l.b16 %v53
    %v148 = vunpack.c.h.b16 %v53
    %v149 = vunpack.c.l.b16 %v54
    %v150 = vunpack.c.h.b16 %v54
    %v151 = vunpack.c.l.b16 %v55
    %v152 = vunpack.c.h.b16 %v55
    %v153 = vunpack.c.l.b16 %v56
    %v154 = vunpack.c.h.b16 %v56
    %v155 = vunpack.c.l.b16 %v57
    %v156 = vunpack.c.h.b16 %v57
    %v157 = vunpack.c.l.b16 %v58
    %v158 = vunpack.c.h.b16 %v58
    %v159 = vunpack.c.l.b16 %v59
    %v160 = vunpack.c.h.b16 %v59
    %v161 = vunpack.c.l.b16 %v60
    %v162 = vunpack.c.h.b16 %v60
    %v163 = vunpack.c.l.b16 %v61
    %v164 = vunpack.c.h.b16 %v61
    %v165 = vunpack.c.l.b16 %v62
    %v166 = vunpack.c.h.b16 %v62
    %v167 = vunpack.c.l.b16 %v63
    %v168 = vunpack.c.h.b16 %v63
    %v169 = vunpack.c.l.b16 %v64
    %v170 = vunpack.c.h.b16 %v64
    %v171 = vunpack.c.l.b16 %v65
    %v172 = vunpack.c.h.b16 %v65
    %v173 = vunpack.c.l.b16 %v66
    %v174 = vunpack.c.h.b16 %v66
    %v175 = vunpack.c.l.b16 %v67
    %v176 = vunpack.c.h.b16 %v67
    %v177 = vunpack.c.l.b16 %v68
    %v178 = vunpack.c.h.b16 %v68
    %v179 = vunpack.c.l.b16 %v69
    %v180 = vunpack.c.h.b16 %v69
    %v181 = vunpack.c.l.b16 %v70
    %v182 = vunpack.c.h.b16 %v70
    %v183 = vunpack.c.l.b16 %v71
    %v184 = vunpack.c.h.b16 %v71
    %v185 = vunpack.c.l.b16 %v72
    %v186 = vunpack.c.h.b16 %v72
    %v187 = vunpack.c.l.b16 %v73
    %v188 = vunpack.c.h.b16 %v73
    %v189 = vpack.c.b16 %v127, %v125
    %v190 = vpack.c.b16 %v128, %v126
    %v191 = vpack.c.b16 %v131, %v129
    %v192 = vpack.c.b16 %v132, %v130
    %v193 = vpack.c.b16 %v135, %v133
    %v194 = vpack.c.b16 %v136, %v134
    %v195 = vpack.c.b16 %v139, %v137
    %v196 = vpack.c.b16 %v140, %v138
    %v197 = vpack.c.b16 %v143, %v141
    %v198 = vpack.c.b16 %v144, %v142
    %v199 = vpack.c.b16 %v147, %v145
    %v200 = vpack.c.b16 %v148, %v146
    %v201 = vpack.c.b16 %v151, %v149
    %v202 = vpack.c.b16 %v152, %v150
    %v203 = vpack.c.b16 %v155, %v153
    %v204 = vpack.c.b16 %v156, %v154
    %v205 = vpack.c.b16 %v159, %v157
    %v206 = vpack.c.b16 %v160, %v158
    %v207 = vpack.c.b16 %v163, %v161
    %v208 = vpack.c.b16 %v164, %v162
    %v209 = vpack.c.b16 %v167, %v165
    %v210 = vpack.c.b16 %v168, %v166
    %v211 = vpack.c.b16 %v171, %v169
    %v212 = vpack.c.b16 %v172, %v170
    %v213 = vpack.c.b16 %v175, %v173
    %v214 = vpack.c.b16 %v176, %v174
    %v215 = vpack.c.b16 %v179, %v177
    %v216 = vpack.c.b16 %v180, %v178
    %v217 = vpack.c.b16 %v183, %v181
    %v218 = vpack.c.b16 %v184, %v182
    %v219 = vpack.c.b16 %v187, %v185
    %v220 = vpack.c.b16 %v188, %v186
    %253 = vmatprep.subr.bf16.mxu0 %v190
    %254 = vmatpush1.bf16.msra.mxu0 %v189
    %255 = vmatprep.subr.bf16.mxu0 %v192
    %256 = vmatpush1.bf16.msra.mxu0 %v191
    %257 = vmatprep.subr.bf16.mxu0 %v194
    %258 = vmatpush1.bf16.msra.mxu0 %v193
    %259 = vmatprep.subr.bf16.mxu0 %v196
    %260 = vmatpush1.bf16.msra.mxu0 %v195
    %261 = vmatprep.subr.bf16.mxu0 %v198
    %262 = vmatpush1.bf16.msra.mxu0 %v197
    %263 = vmatprep.subr.bf16.mxu0 %v200
    %264 = vmatpush1.bf16.msra.mxu0 %v199
    %265 = vmatprep.subr.bf16.mxu0 %v202
    %266 = vmatpush1.bf16.msra.mxu0 %v201
    %267 = vmatprep.subr.bf16.mxu0 %v204
    %268 = vmatpush1.bf16.msra.mxu0 %v203
    %269 = vmatprep.subr.bf16.mxu0 %v206
    %270 = vmatpush1.bf16.msra.mxu0 %v205
    %271 = vmatprep.subr.bf16.mxu0 %v208
    %272 = vmatpush1.bf16.msra.mxu0 %v207
    %273 = vmatprep.subr.bf16.mxu0 %v210
    %274 = vmatpush1.bf16.msra.mxu0 %v209
    %275 = vmatprep.subr.bf16.mxu0 %v212
    %276 = vmatpush1.bf16.msra.mxu0 %v211
    %277 = vmatprep.subr.bf16.mxu0 %v214
    %278 = vmatpush1.bf16.msra.mxu0 %v213
    %279 = vmatprep.subr.bf16.mxu0 %v216
    %280 = vmatpush1.bf16.msra.mxu0 %v215
    %281 = vmatprep.subr.bf16.mxu0 %v218
    %282 = vmatpush1.bf16.msra.mxu0 %v217
    %283 = vmatprep.subr.bf16.mxu0 %v220
    %284 = vmatpush1.bf16.msra.mxu0 %v219
    %285 = vmatprep.mubr.bf16.mxu0 %v90
    %286 = vmatmul.mubr.bf16.gmra.mrb[0].mxu0 %v89
    %v287 = vpop.f32.mrb[0].mxu0
    %v288 = vadd.f32 %v79, %v287
    %v289 = vpop.f32.mrb[0].mxu0
    %v290 = vadd.f32 %v83, %v289
    %v291 = vpop.f32.mrb[0].mxu0
    %v292 = vpop.f32.mrb[0].mxu0
    %293 = vdwg.mxu0
    %294 = vst [vmem:[#allocation7] sm:$0xff] %v288
    %295 = vst [vmem:[#allocation7 + $0x8] sm:$0xff] %v290
    // Predicated region
    $region22: #{tpu_custom_call.1} parent=1 // pred_check
      _
    $region23: #{tpu_custom_call.1} parent=1 // pred_check_branch
      %297 = sbr.rel (0) target = $region25
    $region24: #{tpu_custom_call.1} parent=1 // pred_region
      %s299 = ssub.s32 256, 256
      %300 = vsyncadd [#allocation4], %s299
      %s302 = sshll.u32 [#allocation7], 4
      %s303 = int_to_ptr.vmem [resolvable:$true] %s302
      %305 = dma.vmem_to_hbm [thread:$0]  %s303, 256, %s3, [#allocation4]
    $region25: #{tpu_custom_call.1} parent=1 // pred_fallthru
      _
    // Predicated region
    $region26: #{tpu_custom_call.1} parent=1 // pred_check
      _
    $region27: #{tpu_custom_call.1} parent=1 // pred_check_branch
      %307 = sbr.rel (0) target = $region29
    $region28: #{tpu_custom_call.1} parent=1 // pred_region
      %308 = dma.done [#allocation4], 256
    $region29: #{tpu_custom_call.1} parent=1 // pred_fallthru
      _
    %309 = vsyncpa [#allocation3], 1
    %310 = vsyncpa [#allocation6], 1
    %311 = vsyncpa [#allocation4], 1

</llo_original>
